<compile_context>
chip_gen: v7x
topology: tpu7x:2x2x1
jax: 0.10.0
libtpu: 0.0.40
codegen_flags: <defaults>
</compile_context>

<pallas_src>
import functools

import jax
import jax.numpy as jnp
from jax.experimental import pallas as pl
from jax.experimental.pallas import tpu as pltpu

IN_DIM = 256
HID_DIM = 256
OUT_DIM = 10
OUT_PAD = 16  # small padded output width (full last dim of the out array)


def _round_up(x, m):
    return ((x + m - 1) // m) * m


def mlp_kernel(x_ref, w1_ref, b1_ref, w2_ref, b2_ref, o_ref):
    # x: (TB, 256) f32, w1: (256, 256) bf16, b1: (1, 256) f32,
    # w2: (256, 16) bf16 (zero-padded cols 10..15),
    # b2: (1, 16) f32 (-1e30 in padded cols), o: (TB, 16) f32.
    x = x_ref[...].astype(jnp.bfloat16)

    # hid = sigmoid(x @ W1 + b1)  — bf16 MXU matmul, f32 accumulation.
    h = jnp.dot(x, w1_ref[...], preferred_element_type=jnp.float32) + b1_ref[...]
    h = jax.nn.sigmoid(h)                      # f32 elementwise (EUP)

    # logits = h @ W2 + b2 ; padded columns get bias -1e30 -> exp() == 0.
    logits = (
        jnp.dot(h.astype(jnp.bfloat16), w2_ref[...],
                preferred_element_type=jnp.float32)
        + b2_ref[...]
    )

    # Numerically-stable softmax over the last axis (padded cols contribute 0).
    m = jnp.max(logits, axis=-1, keepdims=True)
    e = jnp.exp(logits - m)
    denom = jnp.sum(e, axis=-1, keepdims=True)
    # Exact divide -> row sums are exactly 1.0 up to f32 rounding.
    o_ref[...] = (e / denom).astype(o_ref.dtype)


def _select_batch_tile(B, cap):
    # Aim for >= 4 grid steps (megacore sharding + pipeline overlap), with a
    # 256-row floor (amortize per-step overhead) and a cap for VMEM headroom,
    # but never a tile larger than the (sublane-rounded) batch itself.
    desired = _round_up(pl.cdiv(B, 4), 8)
    tb = min(max(desired, 256), cap)
    tb = max(8, min(tb, _round_up(B, 8)))
    return tb


@functools.partial(jax.jit, static_argnames=("block_b",))
def net_forward(x, w1, b1, w2, b2, *, block_b=2048):
    """x: (B, 256) f32.  w1: (256,256) torch layout (out,in); w2: (10,256)."""
    B = x.shape[0]
    tb = _select_batch_tile(B, block_b)
    grid = (pl.cdiv(B, tb),)  # ragged last block handled by Pallas masking

    # Pre-transpose weights to (in, out) and cast matmul operands to bf16.
    w1_t = w1.T.astype(jnp.bfloat16)                            # (256, 256)
    w2_t = jnp.zeros((HID_DIM, OUT_PAD), jnp.float32)
    w2_t = w2_t.at[:, :OUT_DIM].set(w2.T).astype(jnp.bfloat16)  # (256, 16)
    b1_r = b1.reshape(1, HID_DIM).astype(jnp.float32)           # (1, 256)
    b2_r = jnp.full((1, OUT_PAD), -1e30, jnp.float32)
    b2_r = b2_r.at[0, :OUT_DIM].set(b2)                         # (1, 16)

    out = pl.pallas_call(
        mlp_kernel,
        out_shape=jax.ShapeDtypeStruct((B, OUT_PAD), jnp.float32),
        grid=grid,
        in_specs=[
            pl.BlockSpec((tb, IN_DIM), lambda i: (i, 0)),        # x: tiled over batch
            pl.BlockSpec((IN_DIM, HID_DIM), lambda i: (0, 0)),   # W1: VMEM-resident
            pl.BlockSpec((1, HID_DIM), lambda i: (0, 0)),        # b1: VMEM-resident
            pl.BlockSpec((HID_DIM, OUT_PAD), lambda i: (0, 0)),  # W2: VMEM-resident
            pl.BlockSpec((1, OUT_PAD), lambda i: (0, 0)),        # b2: VMEM-resident
        ],
        out_specs=pl.BlockSpec((tb, OUT_PAD), lambda i: (i, 0)),
        compiler_params=pltpu.CompilerParams(
            dimension_semantics=("parallel",),
        ),
        cost_estimate=pl.CostEstimate(
            flops=2 * B * IN_DIM * HID_DIM + 2 * B * HID_DIM * OUT_PAD,
            transcendentals=B * (HID_DIM + OUT_PAD),
            bytes_accessed=(
                B * IN_DIM * 4            # x in (f32)
                + B * OUT_PAD * 4         # out (f32, 16 lanes)
                + IN_DIM * HID_DIM * 2    # W1 bf16
                + HID_DIM * OUT_PAD * 2   # W2 bf16
                + (HID_DIM + OUT_PAD) * 4 # biases
            ),
        ),
    )(x, w1_t, b1_r, w2_t, b2_r)

    return out[:, :OUT_DIM]


def reference_forward(x, w1, b1, w2, b2):
    h = jax.nn.sigmoid(x @ w1.T + b1)
    logits = h @ w2.T + b2
    return jax.nn.softmax(logits, axis=1)


if __name__ == "__main__":
    key = jax.random.PRNGKey(0)
    k_x, k_w1, k_b1, k_w2, k_b2, k_x2, k_x3 = jax.random.split(key, 7)

    # Deterministic synthetic parameters (torch Linear layout: (out, in)).
    bound1 = 1.0 / (IN_DIM ** 0.5)
    bound2 = 1.0 / (HID_DIM ** 0.5)
    w1 = jax.random.uniform(k_w1, (HID_DIM, IN_DIM), jnp.float32, -bound1, bound1)
    b1 = jax.random.uniform(k_b1, (HID_DIM,), jnp.float32, -bound1, bound1)
    w2 = jax.random.uniform(k_w2, (OUT_DIM, HID_DIM), jnp.float32, -bound2, bound2)
    b2 = jax.random.uniform(k_b2, (OUT_DIM,), jnp.float32, -bound2, bound2)

    def check(x, tag):
        out = jax.block_until_ready(net_forward(x, w1, b1, w2, b2))
        ref = reference_forward(x, w1, b1, w2, b2)
        assert out.shape == (x.shape[0], OUT_DIM)
        # bf16 MXU operands -> loosened tolerance vs f32 reference.
        assert jnp.allclose(out, ref, atol=2e-2, rtol=2e-2), f"mismatch vs reference ({tag})"
        assert jnp.allclose(jnp.sum(out, axis=1), 1.0, atol=1e-3), f"row sums != 1 ({tag})"

    # Small sublane-aligned batch (single grid step).
    check(jax.random.normal(k_x, (8, IN_DIM), dtype=jnp.float32), "B=8")
    # Non-multiple-of-8 batch (ragged block, no jnp.pad pass).
    check(jax.random.normal(k_x2, (50, IN_DIM), dtype=jnp.float32), "B=50")
    # Larger batch: multiple grid steps + ragged last block.
    check(jax.random.normal(k_x3, (600, IN_DIM), dtype=jnp.float32), "B=600")

    print("KERNEL_OK")
</pallas_src>

<mosaic_0001>
module attributes {stable_mosaic.version = 11 : i64} {
  func.func @mlp_kernel(%arg0: i32, %arg1: memref<8x256xf32, #tpu.memory_space<vmem>>, %arg2: memref<256x256xbf16, #tpu.memory_space<vmem>>, %arg3: memref<1x256xf32, #tpu.memory_space<vmem>>, %arg4: memref<256x16xbf16, #tpu.memory_space<vmem>>, %arg5: memref<1x16xf32, #tpu.memory_space<vmem>>, %arg6: memref<8x16xf32, #tpu.memory_space<vmem>>) attributes {dimension_semantics = [#tpu.dimension_semantics<parallel>], iteration_bounds = array<i64: 1>, scalar_prefetch = 0 : i64, scratch_operands = 0 : i64, tpu.core_type = #tpu.core_type<tc>, window_params = [{transform_indices = @transform_0, window_bounds = array<i64: 8, 256>}, {pipeline_mode = #tpu.pipeline_mode<synchronous>, transform_indices = @transform_1, window_bounds = array<i64: 256, 256>}, {pipeline_mode = #tpu.pipeline_mode<synchronous>, transform_indices = @transform_2, window_bounds = array<i64: 1, 256>}, {pipeline_mode = #tpu.pipeline_mode<synchronous>, transform_indices = @transform_3, window_bounds = array<i64: 256, 16>}, {pipeline_mode = #tpu.pipeline_mode<synchronous>, transform_indices = @transform_4, window_bounds = array<i64: 1, 16>}, {transform_indices = @transform_5, window_bounds = array<i64: 8, 16>}]} {
    %c0 = arith.constant 0 : index
    %c0_0 = arith.constant 0 : index
    %0 = vector.load %arg1[%c0, %c0_0] : memref<8x256xf32, #tpu.memory_space<vmem>>, vector<8x256xf32>
    %1 = arith.truncf %0 : vector<8x256xf32> to vector<8x256xbf16>
    %c0_1 = arith.constant 0 : index
    %c0_2 = arith.constant 0 : index
    %2 = vector.load %arg2[%c0_1, %c0_2] : memref<256x256xbf16, #tpu.memory_space<vmem>>, vector<256x256xbf16>
    %cst = arith.constant dense<0.000000e+00> : vector<8x256xf32>
    %3 = tpu.matmul %1, %2, %cst {dimension_numbers = #tpu.dot_dimension_numbers<[1], [0], [0], [1], [0, 0, 1, 1], [], []>} : vector<8x256xbf16>, vector<256x256xbf16>, vector<8x256xf32> -> vector<8x256xf32>
    %c0_3 = arith.constant 0 : index
    %c0_4 = arith.constant 0 : index
    %4 = vector.load %arg3[%c0_3, %c0_4] : memref<1x256xf32, #tpu.memory_space<vmem>>, vector<1x256xf32>
    %5 = vector.broadcast %4 : vector<1x256xf32> to vector<8x256xf32>
    %6 = arith.addf %3, %5 : vector<8x256xf32>
    %7 = arith.negf %6 : vector<8x256xf32>
    %8 = math.exp %7 : vector<8x256xf32>
    %cst_5 = arith.constant 1.000000e+00 : f32
    %9 = vector.broadcast %cst_5 : f32 to vector<8x256xf32>
    %10 = arith.addf %9, %8 : vector<8x256xf32>
    %11 = arith.divf %9, %10 : vector<8x256xf32>
    %12 = arith.truncf %11 : vector<8x256xf32> to vector<8x256xbf16>
    %c0_6 = arith.constant 0 : index
    %c0_7 = arith.constant 0 : index
    %13 = vector.load %arg4[%c0_6, %c0_7] : memref<256x16xbf16, #tpu.memory_space<vmem>>, vector<256x16xbf16>
    %cst_8 = arith.constant dense<0.000000e+00> : vector<8x16xf32>
    %14 = tpu.matmul %12, %13, %cst_8 {dimension_numbers = #tpu.dot_dimension_numbers<[1], [0], [0], [1], [0, 0, 1, 1], [], []>} : vector<8x256xbf16>, vector<256x16xbf16>, vector<8x16xf32> -> vector<8x16xf32>
    %c0_9 = arith.constant 0 : index
    %c0_10 = arith.constant 0 : index
    %15 = vector.load %arg5[%c0_9, %c0_10] : memref<1x16xf32, #tpu.memory_space<vmem>>, vector<1x16xf32>
    %16 = vector.broadcast %15 : vector<1x16xf32> to vector<8x16xf32>
    %17 = arith.addf %14, %16 : vector<8x16xf32>
    %cst_11 = arith.constant dense<0xFF800000> : vector<8xf32>
    %18 = vector.multi_reduction <maximumf>, %17, %cst_11 [1] : vector<8x16xf32> to vector<8xf32>
    %19 = vector.shape_cast %18 : vector<8xf32> to vector<8x1xf32>
    %20 = vector.broadcast %19 : vector<8x1xf32> to vector<8x16xf32>
    %21 = arith.subf %17, %20 : vector<8x16xf32>
    %22 = math.exp %21 : vector<8x16xf32>
    %cst_12 = arith.constant dense<0.000000e+00> : vector<8xf32>
    %23 = vector.multi_reduction <add>, %22, %cst_12 [1] : vector<8x16xf32> to vector<8xf32>
    %24 = vector.shape_cast %23 : vector<8xf32> to vector<8x1xf32>
    %25 = vector.broadcast %24 : vector<8x1xf32> to vector<8x16xf32>
    %26 = arith.divf %22, %25 : vector<8x16xf32>
    %c0_13 = arith.constant 0 : index
    %c0_14 = arith.constant 0 : index
    %27 = vector.load %arg6[%c0_13, %c0_14] : memref<8x16xf32, #tpu.memory_space<vmem>>, vector<8x16xf32>
    tpu.vector_store %arg6[%c0_13, %c0_14], %26 {strides = array<i32>} : memref<8x16xf32, #tpu.memory_space<vmem>>, vector<8x16xf32>,
    return
  }
  func.func @transform_0(%arg0: i32) -> (i32, i32) {
    %c0_i32 = arith.constant 0 : i32
    %c0_i32_0 = arith.constant 0 : i32
    return %arg0, %c0_i32 : i32, i32
  }
  func.func @transform_1(%arg0: i32) -> (i32, i32) {
    %c0_i32 = arith.constant 0 : i32
    %c0_i32_0 = arith.constant 0 : i32
    %c0_i32_1 = arith.constant 0 : i32
    return %c0_i32, %c0_i32_0 : i32, i32
  }
  func.func @transform_2(%arg0: i32) -> (i32, i32) {
    %c0_i32 = arith.constant 0 : i32
    %c0_i32_0 = arith.constant 0 : i32
    %c0_i32_1 = arith.constant 0 : i32
    return %c0_i32, %c0_i32_0 : i32, i32
  }
  func.func @transform_3(%arg0: i32) -> (i32, i32) {
    %c0_i32 = arith.constant 0 : i32
    %c0_i32_0 = arith.constant 0 : i32
    %c0_i32_1 = arith.constant 0 : i32
    return %c0_i32, %c0_i32_0 : i32, i32
  }
  func.func @transform_4(%arg0: i32) -> (i32, i32) {
    %c0_i32 = arith.constant 0 : i32
    %c0_i32_0 = arith.constant 0 : i32
    %c0_i32_1 = arith.constant 0 : i32
    return %c0_i32, %c0_i32_0 : i32, i32
  }
  func.func @transform_5(%arg0: i32) -> (i32, i32) {
    %c0_i32 = arith.constant 0 : i32
    %c0_i32_0 = arith.constant 0 : i32
    return %arg0, %c0_i32 : i32, i32
  }
}

</mosaic_0001>

<llo_original>
// kernel: net_forward.1
$region0: #{net_forward.1}
  #allocation0 [shape = 'u32[]', space=smem, size = 0x4, offset = 0x4, fixed_abs, tag = 'smem constant byte address 0x4 - core index']
  #allocation1 [shape = 'u32[144,128]{1,0:T(1,128)}', space=vmem, size = 0x12000, scoped, tag = 'internal scratch']
  %s0 = inlined_call_operand.vmem [shape: f32[8,256], index: 0, kind: input, shape index: {}]
  %s1 = inlined_call_operand.vmem [shape: bf16[256,256], index: 1, kind: input, shape index: {}]
  %s2 = inlined_call_operand.vmem [shape: f32[1,256], index: 2, kind: input, shape index: {}]
  %s3 = inlined_call_operand.vmem [shape: bf16[256,16], index: 3, kind: input, shape index: {}]
  %s4 = inlined_call_operand.vmem [shape: f32[1,16], index: 4, kind: input, shape index: {}]
  %s5 = inlined_call_operand.hbm [shape: f32[8,16], index: 5, kind: output, shape index: {}]
  %s6 = sld [smem:[#allocation0]]
  $region30: #{net_forward.1} parent=0
    _
  %s8 = ssub.s32 1, %s6
  %s9 = scalar_select 0, %s8, %s6
  $region1: #{net_forward.1} parent=0
    #allocation2 [shape = 'u8[4096]{0}', space=vmem, size = 0x1000, scoped, tag = 'output window, operand 0, single buffered']
    #allocation3 [shape = 's32[1]{0}', space=sflag, size = 0x4, scoped, tag = 'scoped memory for net_forward.1']
    %10 = vsyncpa [#allocation3], 0
    // Predicated region
    $region2: #{net_forward.1} parent=1 // pred_check
      _
    $region3: #{net_forward.1} parent=1 // pred_check_branch
      %12 = sbr.rel (0) target = $region5
    $region4: #{net_forward.1} parent=1 // pred_region
      _
    $region5: #{net_forward.1} parent=1 // pred_fallthru
      _
    // Predicated region
    $region6: #{net_forward.1} parent=1 // pred_check
      _
    $region7: #{net_forward.1} parent=1 // pred_check_branch
      %14 = sbr.rel (0) target = $region9
    $region8: #{net_forward.1} parent=1 // pred_region
      _
    $region9: #{net_forward.1} parent=1 // pred_fallthru
      _
    // Predicated region
    $region10: #{net_forward.1} parent=1 // pred_check
      _
    $region11: #{net_forward.1} parent=1 // pred_check_branch
      %16 = sbr.rel (0) target = $region13
    $region12: #{net_forward.1} parent=1 // pred_region
      _
    $region13: #{net_forward.1} parent=1 // pred_fallthru
      _
    // Predicated region
    $region14: #{net_forward.1} parent=1 // pred_check
      _
    $region15: #{net_forward.1} parent=1 // pred_check_branch
      %18 = sbr.rel (0) target = $region17
    $region16: #{net_forward.1} parent=1 // pred_region
      _
    $region17: #{net_forward.1} parent=1 // pred_fallthru
      _
    // Predicated region
    $region18: #{net_forward.1} parent=1 // pred_check
      _
    $region19: #{net_forward.1} parent=1 // pred_check_branch
      %20 = sbr.rel (0) target = $region21
    $region20: #{net_forward.1} parent=1 // pred_region
      _
    $region21: #{net_forward.1} parent=1 // pred_fallthru
      _
    %v22 = vld [vmem:[%s0] sm:$0xff]
    %v23 = vld [vmem:[%s0 + $0x8] sm:$0xff]
    %v24 = vpack.c.bf16 %v22, %v22
    %v25 = vpack.c.bf16 %v23, %v23
    %v26 = vld [vmem:[%s1] sm:$0xff]
    %v27 = vld [vmem:[%s1 + $0x8] sm:$0xff]
    %v28 = vld [vmem:[%s1 + $0x10] sm:$0xff]
    %v29 = vld [vmem:[%s1 + $0x18] sm:$0xff]
    %v30 = vld [vmem:[%s1 + $0x20] sm:$0xff]
    %v31 = vld [vmem:[%s1 + $0x28] sm:$0xff]
    %v32 = vld [vmem:[%s1 + $0x30] sm:$0xff]
    %v33 = vld [vmem:[%s1 + $0x38] sm:$0xff]
    %v34 = vld [vmem:[%s1 + $0x40] sm:$0xff]
    %v35 = vld [vmem:[%s1 + $0x48] sm:$0xff]
    %v36 = vld [vmem:[%s1 + $0x50] sm:$0xff]
    %v37 = vld [vmem:[%s1 + $0x58] sm:$0xff]
    %v38 = vld [vmem:[%s1 + $0x60] sm:$0xff]
    %v39 = vld [vmem:[%s1 + $0x68] sm:$0xff]
    %v40 = vld [vmem:[%s1 + $0x70] sm:$0xff]
    %v41 = vld [vmem:[%s1 + $0x78] sm:$0xff]
    %v42 = vld [vmem:[%s1 + $0x80] sm:$0xff]
    %v43 = vld [vmem:[%s1 + $0x88] sm:$0xff]
    %v44 = vld [vmem:[%s1 + $0x90] sm:$0xff]
    %v45 = vld [vmem:[%s1 + $0x98] sm:$0xff]
    %v46 = vld [vmem:[%s1 + $0xa0] sm:$0xff]
    %v47 = vld [vmem:[%s1 + $0xa8] sm:$0xff]
    %v48 = vld [vmem:[%s1 + $0xb0] sm:$0xff]
    %v49 = vld [vmem:[%s1 + $0xb8] sm:$0xff]
    %v50 = vld [vmem:[%s1 + $0xc0] sm:$0xff]
    %v51 = vld [vmem:[%s1 + $0xc8] sm:$0xff]
    %v52 = vld [vmem:[%s1 + $0xd0] sm:$0xff]
    %v53 = vld [vmem:[%s1 + $0xd8] sm:$0xff]
    %v54 = vld [vmem:[%s1 + $0xe0] sm:$0xff]
    %v55 = vld [vmem:[%s1 + $0xe8] sm:$0xff]
    %v56 = vld [vmem:[%s1 + $0xf0] sm:$0xff]
    %v57 = vld [vmem:[%s1 + $0xf8] sm:$0xff]
    %v58 = vld [vmem:[%s2] sm:$0x3]
    %v60 = vlaneseq
    %v61 = vshrl.u32 %v60, 7
    %v62 = vsub.s32 0, %v61
    %v63 = vrot.slane %v58, %v62
    %v64 = vlaneseq
    %v65 = vshrl.u32 %v64, 7
    %v66 = vsub.s32 1, %v65
    %v67 = vrot.slane %v58, %v66
    %v102 = vunpack.c.l.b16 %v26
    %v103 = vunpack.c.h.b16 %v26
    %v104 = vunpack.c.l.b16 %v27
    %v105 = vunpack.c.h.b16 %v27
    %v106 = vunpack.c.l.b16 %v28
    %v107 = vunpack.c.h.b16 %v28
    %v108 = vunpack.c.l.b16 %v29
    %v109 = vunpack.c.h.b16 %v29
    %v110 = vunpack.c.l.b16 %v30
    %v111 = vunpack.c.h.b16 %v30
    %v112 = vunpack.c.l.b16 %v31
    %v113 = vunpack.c.h.b16 %v31
    %v114 = vunpack.c.l.b16 %v32
    %v115 = vunpack.c.h.b16 %v32
    %v116 = vunpack.c.l.b16 %v33
    %v117 = vunpack.c.h.b16 %v33
    %v118 = vunpack.c.l.b16 %v34
    %v119 = vunpack.c.h.b16 %v34
    %v120 = vunpack.c.l.b16 %v35
    %v121 = vunpack.c.h.b16 %v35
    %v122 = vunpack.c.l.b16 %v36
    %v123 = vunpack.c.h.b16 %v36
    %v124 = vunpack.c.l.b16 %v37
    %v125 = vunpack.c.h.b16 %v37
    %v126 = vunpack.c.l.b16 %v38
    %v127 = vunpack.c.h.b16 %v38
    %v128 = vunpack.c.l.b16 %v39
    %v129 = vunpack.c.h.b16 %v39
    %v130 = vunpack.c.l.b16 %v40
    %v131 = vunpack.c.h.b16 %v40
    %v132 = vunpack.c.l.b16 %v41
    %v133 = vunpack.c.h.b16 %v41
    %v134 = vunpack.c.l.b16 %v42
    %v135 = vunpack.c.h.b16 %v42
    %v136 = vunpack.c.l.b16 %v43
    %v137 = vunpack.c.h.b16 %v43
    %v138 = vunpack.c.l.b16 %v44
    %v139 = vunpack.c.h.b16 %v44
    %v140 = vunpack.c.l.b16 %v45
    %v141 = vunpack.c.h.b16 %v45
    %v142 = vunpack.c.l.b16 %v46
    %v143 = vunpack.c.h.b16 %v46
    %v144 = vunpack.c.l.b16 %v47
    %v145 = vunpack.c.h.b16 %v47
    %v146 = vunpack.c.l.b16 %v48
    %v147 = vunpack.c.h.b16 %v48
    %v148 = vunpack.c.l.b16 %v49
    %v149 = vunpack.c.h.b16 %v49
    %v150 = vunpack.c.l.b16 %v50
    %v151 = vunpack.c.h.b16 %v50
    %v152 = vunpack.c.l.b16 %v51
    %v153 = vunpack.c.h.b16 %v51
    %v154 = vunpack.c.l.b16 %v52
    %v155 = vunpack.c.h.b16 %v52
    %v156 = vunpack.c.l.b16 %v53
    %v157 = vunpack.c.h.b16 %v53
    %v158 = vunpack.c.l.b16 %v54
    %v159 = vunpack.c.h.b16 %v54
    %v160 = vunpack.c.l.b16 %v55
    %v161 = vunpack.c.h.b16 %v55
    %v162 = vunpack.c.l.b16 %v56
    %v163 = vunpack.c.h.b16 %v56
    %v164 = vunpack.c.l.b16 %v57
    %v165 = vunpack.c.h.b16 %v57
    %v166 = vpack.c.b16 %v104, %v102
    %v167 = vpack.c.b16 %v105, %v103
    %v168 = vpack.c.b16 %v108, %v106
    %v169 = vpack.c.b16 %v109, %v107
    %v170 = vpack.c.b16 %v112, %v110
    %v171 = vpack.c.b16 %v113, %v111
    %v172 = vpack.c.b16 %v116, %v114
    %v173 = vpack.c.b16 %v117, %v115
    %v174 = vpack.c.b16 %v120, %v118
    %v175 = vpack.c.b16 %v121, %v119
    %v176 = vpack.c.b16 %v124, %v122
    %v177 = vpack.c.b16 %v125, %v123
    %v178 = vpack.c.b16 %v128, %v126
    %v179 = vpack.c.b16 %v129, %v127
    %v180 = vpack.c.b16 %v132, %v130
    %v181 = vpack.c.b16 %v133, %v131
    %v182 = vpack.c.b16 %v136, %v134
    %v183 = vpack.c.b16 %v137, %v135
    %v184 = vpack.c.b16 %v140, %v138
    %v185 = vpack.c.b16 %v141, %v139
    %v186 = vpack.c.b16 %v144, %v142
    %v187 = vpack.c.b16 %v145, %v143
    %v188 = vpack.c.b16 %v148, %v146
    %v189 = vpack.c.b16 %v149, %v147
    %v190 = vpack.c.b16 %v152, %v150
    %v191 = vpack.c.b16 %v153, %v151
    %v192 = vpack.c.b16 %v156, %v154
    %v193 = vpack.c.b16 %v157, %v155
    %v194 = vpack.c.b16 %v160, %v158
    %v195 = vpack.c.b16 %v161, %v159
    %v196 = vpack.c.b16 %v164, %v162
    %v197 = vpack.c.b16 %v165, %v163
    %230 = vmatprep.subr.bf16.mxu0 %v167
    %231 = vmatpush1.bf16.msra.mxu0 %v166
    %232 = vmatprep.subr.bf16.mxu0 %v169
    %233 = vmatpush1.bf16.msra.mxu0 %v168
    %234 = vmatprep.subr.bf16.mxu0 %v171
    %235 = vmatpush1.bf16.msra.mxu0 %v170
    %236 = vmatprep.subr.bf16.mxu0 %v173
    %237 = vmatpush1.bf16.msra.mxu0 %v172
    %238 = vmatprep.subr.bf16.mxu0 %v175
    %239 = vmatpush1.bf16.msra.mxu0 %v174
    %240 = vmatprep.subr.bf16.mxu0 %v177
    %241 = vmatpush1.bf16.msra.mxu0 %v176
    %242 = vmatprep.subr.bf16.mxu0 %v179
    %243 = vmatpush1.bf16.msra.mxu0 %v178
    %244 = vmatprep.subr.bf16.mxu0 %v181
    %245 = vmatpush1.bf16.msra.mxu0 %v180
    %246 = vmatprep.subr.bf16.mxu0 %v183
    %247 = vmatpush1.bf16.msra.mxu0 %v182
    %248 = vmatprep.subr.bf16.mxu0 %v185
    %249 = vmatpush1.bf16.msra.mxu0 %v184
    %250 = vmatprep.subr.bf16.mxu0 %v187
    %251 = vmatpush1.bf16.msra.mxu0 %v186
    %252 = vmatprep.subr.bf16.mxu0 %v189
    %253 = vmatpush1.bf16.msra.mxu0 %v188
    %254 = vmatprep.subr.bf16.mxu0 %v191
    %255 = vmatpush1.bf16.msra.mxu0 %v190
    %256 = vmatprep.subr.bf16.mxu0 %v193
    %257 = vmatpush1.bf16.msra.mxu0 %v192
    %258 = vmatprep.subr.bf16.mxu0 %v195
    %259 = vmatpush1.bf16.msra.mxu0 %v194
    %260 = vmatprep.subr.bf16.mxu0 %v197
    %261 = vmatpush1.bf16.msra.mxu0 %v196
    %262 = vmatprep.mubr.bf16.mxu0 %v25
    %263 = vmatmul.mubr.bf16.gmra.mrb[0].mxu0 %v24
    %v264 = vpop.f32.mrb[0].mxu0
    %v265 = vadd.f32 %v63, %v264
    %v266 = vpop.f32.mrb[0].mxu0
    %v267 = vadd.f32 %v67, %v266
    %v268 = vpop.f32.mrb[0].mxu0
    %v269 = vpop.f32.mrb[0].mxu0
    %270 = vdwg.mxu0
    %v271 = vxor.u32 %v265, 2147483648
    %v272 = vxor.u32 %v267, 2147483648
    %v273 = vmul.f32 %v271, 1.442695
    %v274 = vpow.pop %v273
    %v275 = vmul.f32 %v272, 1.442695
    %v276 = vpow.pop %v275
    %v277 = vadd.f32 %v274, 1.0
    %v278 = vadd.f32 %v276, 1.0
    %v279 = vrcp.pop %v277
    %v280 = vmul.f32 1.0, %v279
    %v281 = vrcp.pop %v278
    %v282 = vmul.f32 1.0, %v281
    %v283 = vpack.c.bf16 %v280, %v280
    %v284 = vpack.c.bf16 %v282, %v282
    %v285 = vld [vmem:[%s3] sm:$0xf]
    %v286 = vld [vmem:[%s3 + $0x4] sm:$0xf]
    %v287 = vld [vmem:[%s3 + $0x8] sm:$0xf]
    %v288 = vld [vmem:[%s3 + $0xc] sm:$0xf]
    %v289 = vld [vmem:[%s3 + $0x10] sm:$0xf]
    %v290 = vld [vmem:[%s3 + $0x14] sm:$0xf]
    %v291 = vld [vmem:[%s3 + $0x18] sm:$0xf]
    %v292 = vld [vmem:[%s3 + $0x1c] sm:$0xf]
    %v293 = vld [vmem:[%s3 + $0x20] sm:$0xf]
    %v294 = vld [vmem:[%s3 + $0x24] sm:$0xf]
    %v295 = vld [vmem:[%s3 + $0x28] sm:$0xf]
    %v296 = vld [vmem:[%s3 + $0x2c] sm:$0xf]
    %v297 = vld [vmem:[%s3 + $0x30] sm:$0xf]
    %v298 = vld [vmem:[%s3 + $0x34] sm:$0xf]
    %v299 = vld [vmem:[%s3 + $0x38] sm:$0xf]
    %v300 = vld [vmem:[%s3 + $0x3c] sm:$0xf]
    %v301 = vld [vmem:[%s3 + $0x40] sm:$0xf]
    %v302 = vld [vmem:[%s3 + $0x44] sm:$0xf]
    %v303 = vld [vmem:[%s3 + $0x48] sm:$0xf]
    %v304 = vld [vmem:[%s3 + $0x4c] sm:$0xf]
    %v305 = vld [vmem:[%s3 + $0x50] sm:$0xf]
    %v306 = vld [vmem:[%s3 + $0x54] sm:$0xf]
    %v307 = vld [vmem:[%s3 + $0x58] sm:$0xf]
    %v308 = vld [vmem:[%s3 + $0x5c] sm:$0xf]
    %v309 = vld [vmem:[%s3 + $0x60] sm:$0xf]
    %v310 = vld [vmem:[%s3 + $0x64] sm:$0xf]
    %v311 = vld [vmem:[%s3 + $0x68] sm:$0xf]
    %v312 = vld [vmem:[%s3 + $0x6c] sm:$0xf]
    %v313 = vld [vmem:[%s3 + $0x70] sm:$0xf]
    %v314 = vld [vmem:[%s3 + $0x74] sm:$0xf]
    %v315 = vld [vmem:[%s3 + $0x78] sm:$0xf]
    %v316 = vld [vmem:[%s3 + $0x7c] sm:$0xf]
    %v317 = vld [vmem:[%s4] sm:$0x1]
    %v319 = vlaneseq
    %v320 = vshrl.u32 %v319, 7
    %v321 = vsub.s32 0, %v320
    %v322 = vrot.slane %v317, %v321
    %v356 = vunpack.c.l.b16 %v285
    %v357 = vunpack.c.l.b16 %v286
    %v358 = vunpack.c.l.b16 %v287
    %v359 = vunpack.c.l.b16 %v288
    %v360 = vunpack.c.l.b16 %v289
    %v361 = vunpack.c.l.b16 %v290
    %v362 = vunpack.c.l.b16 %v291
    %v363 = vunpack.c.l.b16 %v292
    %v364 = vunpack.c.l.b16 %v293
    %v365 = vunpack.c.l.b16 %v294
    %v366 = vunpack.c.l.b16 %v295
    %v367 = vunpack.c.l.b16 %v296
    %v368 = vunpack.c.l.b16 %v297
    %v369 = vunpack.c.l.b16 %v298
    %v370 = vunpack.c.l.b16 %v299
    %v371 = vunpack.c.l.b16 %v300
    %v372 = vunpack.c.l.b16 %v301
    %v373 = vunpack.c.l.b16 %v302
    %v374 = vunpack.c.l.b16 %v303
    %v375 = vunpack.c.l.b16 %v304
    %v376 = vunpack.c.l.b16 %v305
    %v377 = vunpack.c.l.b16 %v306
    %v378 = vunpack.c.l.b16 %v307
    %v379 = vunpack.c.l.b16 %v308
    %v380 = vunpack.c.l.b16 %v309
    %v381 = vunpack.c.l.b16 %v310
    %v382 = vunpack.c.l.b16 %v311
    %v383 = vunpack.c.l.b16 %v312
    %v384 = vunpack.c.l.b16 %v313
    %v385 = vunpack.c.l.b16 %v314
    %v386 = vunpack.c.l.b16 %v315
    %v387 = vunpack.c.l.b16 %v316
    %v388 = vpack.c.b16 %v357, %v356
    %v389 = vpack.c.b16 %v359, %v358
    %v390 = vpack.c.b16 %v361, %v360
    %v391 = vpack.c.b16 %v363, %v362
    %v392 = vpack.c.b16 %v365, %v364
    %v393 = vpack.c.b16 %v367, %v366
    %v394 = vpack.c.b16 %v369, %v368
    %v395 = vpack.c.b16 %v371, %v370
    %v396 = vpack.c.b16 %v373, %v372
    %v397 = vpack.c.b16 %v375, %v374
    %v398 = vpack.c.b16 %v377, %v376
    %v399 = vpack.c.b16 %v379, %v378
    %v400 = vpack.c.b16 %v381, %v380
    %v401 = vpack.c.b16 %v383, %v382
    %v402 = vpack.c.b16 %v385, %v384
    %v403 = vpack.c.b16 %v387, %v386
    %420 = vmatprep.subr.bf16.mxu0 0
    %421 = vmatpush1.bf16.msra.mxu0 %v388
    %422 = vmatprep.subr.bf16.mxu0 0
    %423 = vmatpush1.bf16.msra.mxu0 %v389
    %424 = vmatprep.subr.bf16.mxu0 0
    %425 = vmatpush1.bf16.msra.mxu0 %v390
    %426 = vmatprep.subr.bf16.mxu0 0
    %427 = vmatpush1.bf16.msra.mxu0 %v391
    %428 = vmatprep.subr.bf16.mxu0 0
    %429 = vmatpush1.bf16.msra.mxu0 %v392
    %430 = vmatprep.subr.bf16.mxu0 0
    %431 = vmatpush1.bf16.msra.mxu0 %v393
    %432 = vmatprep.subr.bf16.mxu0 0
    %433 = vmatpush1.bf16.msra.mxu0 %v394
    %434 = vmatprep.subr.bf16.mxu0 0
    %435 = vmatpush1.bf16.msra.mxu0 %v395
    %436 = vmatprep.subr.bf16.mxu0 0
    %437 = vmatpush1.bf16.msra.mxu0 %v396
    %438 = vmatprep.subr.bf16.mxu0 0
    %439 = vmatpush1.bf16.msra.mxu0 %v397
    %440 = vmatprep.subr.bf16.mxu0 0
    %441 = vmatpush1.bf16.msra.mxu0 %v398
    %442 = vmatprep.subr.bf16.mxu0 0
    %443 = vmatpush1.bf16.msra.mxu0 %v399
    %444 = vmatprep.subr.bf16.mxu0 0
    %445 = vmatpush1.bf16.msra.mxu0 %v400
    %446 = vmatprep.subr.bf16.mxu0 0
    %447 = vmatpush1.bf16.msra.mxu0 %v401
    %448 = vmatprep.subr.bf16.mxu0 0
    %449 = vmatpush1.bf16.msra.mxu0 %v402
    %450 = vmatprep.subr.bf16.mxu0 0
    %451 = vmatpush1.bf16.msra.mxu0 %v403
    %452 = vmatprep.mubr.bf16.mxu0 %v284
    %453 = vmatmul.mubr.bf16.gmra.mrb[0].mxu0 %v283
    %v454 = vpop.f32.mrb[0].mxu0
    %v455 = vadd.f32 %v322, %v454
    %v456 = vpop.f32.mrb[0].mxu0
    %v457 = vpop.f32.mrb[0].mxu0
    %v458 = vpop.f32.mrb[0].mxu0
    %459 = vdwg.mxu0
    %vm460 = vcmask 130048
    %v461 = vsel %vm460, %v455, -inf
    %462 = vmax.xlane.f32.xlu0 %v461
    %v463 = vpop.xlane.xlu0 %462
    %v464 = vsub.f32 %v455, %v463
    %v465 = vmul.f32 %v464, 1.442695
    %v466 = vpow.pop %v465
    %v467 = vsel %vm460, %v466, 0.0
    %468 = vadd.xlane.f32.xlu0 %v467
    %v469 = vpop.xlane.xlu0 %468
    %v470 = vrcp.pop %v469
    %v471 = vmul.f32 %v466, %v470
    %472 = vst.msk [vmem:[#allocation2] sm:$0xff] %vm460, %v471
    // Predicated region
    $region22: #{net_forward.1} parent=1 // pred_check
      _
    $region23: #{net_forward.1} parent=1 // pred_check_branch
      %474 = sbr.rel (0) target = $region25
    $region24: #{net_forward.1} parent=1 // pred_region
      %s476 = ssub.s32 128, 128
      %477 = vsyncadd [#allocation3], %s476
      %s479 = sshll.u32 [#allocation2], 4
      %s480 = int_to_ptr.vmem [resolvable:$true] %s479
      %482 = dma.vmem_to_hbm [thread:$0]  %s480, 128, %s5, [#allocation3]
    $region25: #{net_forward.1} parent=1 // pred_fallthru
      _
    // Predicated region
    $region26: #{net_forward.1} parent=1 // pred_check
      _
    $region27: #{net_forward.1} parent=1 // pred_check_branch
      %484 = sbr.rel (0) target = $region29
    $region28: #{net_forward.1} parent=1 // pred_region
      %485 = dma.done [#allocation3], 128
    $region29: #{net_forward.1} parent=1 // pred_fallthru
      _
    %486 = vsyncpa [#allocation3], 1

</llo_original>
